<compile_context>
chip_gen: v7x
topology: tpu7x:2x2x1
jax: 0.10.0
libtpu: 0.0.40
codegen_flags: <defaults>
</compile_context>

<pallas_src>
import jax
import jax.numpy as jnp
from jax import lax
from jax.experimental import pallas as pl
from jax.experimental.pallas import tpu as pltpu


def _make_linear_kernel(contract_dims):
    """Tile kernel: o = dot_general(x, w, contract_dims) + b (f32 accumulation)."""
    def kernel(x_ref, w_ref, b_ref, o_ref):
        acc = lax.dot_general(
            x_ref[...], w_ref[...],
            dimension_numbers=(contract_dims, ((), ())),
            preferred_element_type=jnp.float32,
        )
        o_ref[...] = (acc + b_ref[...].astype(jnp.float32)).astype(o_ref.dtype)
    return kernel


def _vmem_cap_bytes() -> int:
    # Clamp any scoped-VMEM request to what the chip actually has (v7x: 64 MiB).
    try:
        return int(pltpu.get_tpu_info().vmem_capacity_bytes * 3 // 4)
    except Exception:
        return 48 * 1024 * 1024  # safe on every generation including v7x


def identity_mlp_forward(x: jax.Array, weight: jax.Array, bias: jax.Array,
                         *, tm_max: int = 4096, compute_dtype=None,
                         force_pallas: bool = False) -> jax.Array:
    """y = x @ weight.T + bias over the last axis of x (PyTorch nn.Linear semantics).

    x:      (..., dim)
    weight: (dim, dim)   (out_features, in_features)
    bias:   (dim,)
    """
    orig_shape = x.shape
    out_dtype = x.dtype
    dim = orig_shape[-1]
    assert weight.shape == (dim, dim) and bias.shape == (dim,)

    x2d = x.reshape(-1, dim)
    m = x2d.shape[0]

    # Tiny problems: pallas_call launch + DMA setup dominates; let XLA fuse instead.
    if not force_pallas and m * dim <= 8192:
        return (x2d @ weight.T + bias[None, :]).astype(out_dtype).reshape(orig_shape)

    if compute_dtype is not None:
        x2d = x2d.astype(compute_dtype)
        weight = weight.astype(compute_dtype)
        bias = bias.astype(compute_dtype)

    # Lane-dense packing: (m, dim) -> (m/p, p*dim) with p*dim == 128 when possible.
    pack = 128 // dim if (dim < 128 and 128 % dim == 0) else 1
    if pack > 1 and m % pack != 0:
        # TODO(synk): handle the (<pack)-row remainder without dropping to the
        # lane-sparse path (e.g. a second tiny call) when m % pack != 0.
        pack = 1

    if pack > 1:
        dp = dim * pack                       # == 128
        mp = m // pack
        xk = x2d.reshape(mp, dp)              # free, contiguous reshape
        # Block-diagonal kron(I_p, W^T): packed_row @ wk == concat_i(x_i @ W^T).
        wk = jnp.kron(jnp.eye(pack, dtype=weight.dtype), weight.T)
        bk = jnp.tile(bias, pack).reshape(1, dp)
        contract_dims = ((1,), (0,))          # plain X @ Wk
    else:
        dp = dim
        mp = m
        xk = x2d
        wk = weight                           # contract last vs last -> X @ W^T, no host transpose
        bk = bias.reshape(1, dp)
        contract_dims = ((1,), (1,))

    tm = mp if mp <= tm_max else tm_max
    grid_m = pl.cdiv(mp, tm)                  # ragged last tile: Pallas masks OOB stores

    in_itemsize = jnp.dtype(xk.dtype).itemsize
    out_itemsize = jnp.dtype(out_dtype).itemsize
    # Double-buffered x/out tiles + (double-buffered) resident weight + bias.
    vmem_est = (2 * tm * dp * in_itemsize + 2 * tm * dp * out_itemsize
                + 2 * dp * dp * in_itemsize + 2 * dp * in_itemsize)

    compiler_kwargs = dict(
        dimension_semantics=("arbitrary",) if grid_m == 1 else ("parallel",),
    )
    if vmem_est > 8 * 1024 * 1024:            # v5e default scoped VMEM is only 16 MiB
        # Raise (never meaningfully lower) the scoped limit, clamped to chip capacity.
        want = vmem_est + 8 * 1024 * 1024     # buffers + compiler scratch headroom
        compiler_kwargs["vmem_limit_bytes"] = int(
            min(max(want, 32 * 1024 * 1024), _vmem_cap_bytes()))

    cost = pl.CostEstimate(
        flops=2 * mp * dp * dp,
        transcendentals=0,
        bytes_accessed=(mp * dp * in_itemsize + dp * dp * in_itemsize
                        + dp * in_itemsize + mp * dp * out_itemsize),
    )

    # TODO(synk): if dim grows to production sizes (>~2K), add an N-axis grid split for
    # the weight (v7x only has 64 MiB VMEM) and mark the resident weight/bias BlockSpecs
    # pipeline_mode=pl.Buffered(1) (constant index_map -> revisited block).
    out2d = pl.pallas_call(
        _make_linear_kernel(contract_dims),
        out_shape=jax.ShapeDtypeStruct((mp, dp), out_dtype),
        grid_spec=pltpu.PrefetchScalarGridSpec(
            num_scalar_prefetch=0,
            grid=(grid_m,),
            in_specs=[
                pl.BlockSpec((tm, dp), lambda i: (i, 0)),   # x rows, tiled
                pl.BlockSpec((dp, dp), lambda i: (0, 0)),   # weight, resident
                pl.BlockSpec((1, dp), lambda i: (0, 0)),    # bias, resident
            ],
            out_specs=pl.BlockSpec((tm, dp), lambda i: (i, 0)),
        ),
        compiler_params=pltpu.CompilerParams(**compiler_kwargs),
        cost_estimate=cost,
    )(xk, wk, bk)

    return out2d.reshape(orig_shape)


if __name__ == "__main__":
    # Module config: dim = 32; input shaped (batch=2, seq=8, dim=32).
    dim = 32
    batch, seq = 2, 8

    key = jax.random.PRNGKey(0)
    x = jax.random.normal(key, (batch, seq, dim), dtype=jnp.float32)

    # Deterministic params per IdentityMLP.initialize_weights_ones(): all ones.
    weight = jnp.ones((dim, dim), dtype=jnp.float32)   # (out_features, in_features)
    bias = jnp.ones((dim,), dtype=jnp.float32)

    ref = x @ weight.T + bias

    # 1) Pallas kernel on the shipped tiny config (force past the XLA fallback).
    y = jax.block_until_ready(identity_mlp_forward(x, weight, bias, force_pallas=True))
    assert y.shape == x.shape
    assert jnp.allclose(y, ref, atol=1e-5, rtol=1e-5)

    # 2) Auto path for the tiny config (fused XLA fallback) must match too.
    y_auto = jax.block_until_ready(identity_mlp_forward(x, weight, bias))
    assert jnp.allclose(y_auto, ref, atol=1e-5, rtol=1e-5)

    # 3) Larger M: lane-packed tiles, multi-step "parallel" grid with a ragged tail.
    big_rows = 4 * (2 * 4096 + 1000)   # packed rows = 9192 -> grid = (3,), ragged last tile
    xb = jax.random.normal(jax.random.PRNGKey(1), (big_rows, dim), dtype=jnp.float32)
    refb = xb @ weight.T + bias
    yb = jax.block_until_ready(identity_mlp_forward(xb, weight, bias))
    assert yb.shape == xb.shape
    assert jnp.allclose(yb, refb, atol=1e-4, rtol=1e-5)

    # 4) bf16-input path (HBM-bound large-M case); accumulation stays f32.
    yb16 = jax.block_until_ready(
        identity_mlp_forward(xb, weight, bias, compute_dtype=jnp.bfloat16))
    refb16 = xb.astype(jnp.bfloat16).astype(jnp.float32) @ weight.T + bias
    assert jnp.allclose(yb16, refb16, atol=1e-3, rtol=1e-3)

    print("KERNEL_OK")
</pallas_src>

<mosaic_0001>
module attributes {stable_mosaic.version = 11 : i64} {
  func.func @kernel(%arg0: i32, %arg1: memref<4x128xf32, #tpu.memory_space<vmem>>, %arg2: memref<128x128xf32, #tpu.memory_space<vmem>>, %arg3: memref<1x128xf32, #tpu.memory_space<vmem>>, %arg4: memref<4x128xf32, #tpu.memory_space<vmem>>) attributes {dimension_semantics = [#tpu.dimension_semantics<arbitrary>], iteration_bounds = array<i64: 1>, scalar_prefetch = 0 : i64, scratch_operands = 0 : i64, tpu.core_type = #tpu.core_type<tc>, window_params = [{transform_indices = @transform_0, window_bounds = array<i64: 4, 128>}, {pipeline_mode = #tpu.pipeline_mode<synchronous>, transform_indices = @transform_1, window_bounds = array<i64: 128, 128>}, {pipeline_mode = #tpu.pipeline_mode<synchronous>, transform_indices = @transform_2, window_bounds = array<i64: 1, 128>}, {transform_indices = @transform_3, window_bounds = array<i64: 4, 128>}]} {
    %c0 = arith.constant 0 : index
    %c0_0 = arith.constant 0 : index
    %0 = vector.load %arg1[%c0, %c0_0] : memref<4x128xf32, #tpu.memory_space<vmem>>, vector<4x128xf32>
    %c0_1 = arith.constant 0 : index
    %c0_2 = arith.constant 0 : index
    %1 = vector.load %arg2[%c0_1, %c0_2] : memref<128x128xf32, #tpu.memory_space<vmem>>, vector<128x128xf32>
    %cst = arith.constant dense<0.000000e+00> : vector<4x128xf32>
    %2 = tpu.matmul %0, %1, %cst {dimension_numbers = #tpu.dot_dimension_numbers<[1], [0], [0], [1], [0, 0, 1, 1], [], []>} : vector<4x128xf32>, vector<128x128xf32>, vector<4x128xf32> -> vector<4x128xf32>
    %c0_3 = arith.constant 0 : index
    %c0_4 = arith.constant 0 : index
    %3 = vector.load %arg3[%c0_3, %c0_4] : memref<1x128xf32, #tpu.memory_space<vmem>>, vector<1x128xf32>
    %4 = vector.broadcast %3 : vector<1x128xf32> to vector<4x128xf32>
    %5 = arith.addf %2, %4 : vector<4x128xf32>
    %c0_5 = arith.constant 0 : index
    %c0_6 = arith.constant 0 : index
    %6 = vector.load %arg4[%c0_5, %c0_6] : memref<4x128xf32, #tpu.memory_space<vmem>>, vector<4x128xf32>
    tpu.vector_store %arg4[%c0_5, %c0_6], %5 {strides = array<i32>} : memref<4x128xf32, #tpu.memory_space<vmem>>, vector<4x128xf32>,
    return
  }
  func.func @transform_0(%arg0: i32) -> (i32, i32) {
    %c0_i32 = arith.constant 0 : i32
    %c0_i32_0 = arith.constant 0 : i32
    return %arg0, %c0_i32 : i32, i32
  }
  func.func @transform_1(%arg0: i32) -> (i32, i32) {
    %c0_i32 = arith.constant 0 : i32
    %c0_i32_0 = arith.constant 0 : i32
    %c0_i32_1 = arith.constant 0 : i32
    return %c0_i32, %c0_i32_0 : i32, i32
  }
  func.func @transform_2(%arg0: i32) -> (i32, i32) {
    %c0_i32 = arith.constant 0 : i32
    %c0_i32_0 = arith.constant 0 : i32
    %c0_i32_1 = arith.constant 0 : i32
    return %c0_i32, %c0_i32_0 : i32, i32
  }
  func.func @transform_3(%arg0: i32) -> (i32, i32) {
    %c0_i32 = arith.constant 0 : i32
    %c0_i32_0 = arith.constant 0 : i32
    return %arg0, %c0_i32 : i32, i32
  }
}

</mosaic_0001>

<llo_original>
// kernel: tpu_custom_call.1
$region0: #{tpu_custom_call.1}
  #allocation0 [shape = 'u32[]', space=smem, size = 0x4, offset = 0x4, fixed_abs, tag = 'smem constant byte address 0x4 - core index']
  #allocation1 [shape = 'u32[144,128]{1,0:T(1,128)}', space=vmem, size = 0x12000, scoped, tag = 'internal scratch']
  %s0 = inlined_call_operand.hbm [shape: f32[4,128], index: 0, kind: input, shape index: {}]
  %s1 = inlined_call_operand.hbm [shape: f32[128,128], index: 1, kind: input, shape index: {}]
  %s2 = inlined_call_operand.vmem [shape: f32[1,128], index: 2, kind: input, shape index: {}]
  %s3 = inlined_call_operand.hbm [shape: f32[4,128], index: 3, kind: output, shape index: {}]
  %s4 = sld [smem:[#allocation0]]
  $region30: #{tpu_custom_call.1} parent=0
    _
  %s6 = ssub.s32 1, %s4
  %s7 = scalar_select 0, %s6, %s4
  $region1: #{tpu_custom_call.1} parent=0
    #allocation2 [shape = 'u8[2048]{0}', space=vmem, size = 0x800, scoped, tag = 'input window, operand 0, single buffered']
    #allocation3 [shape = 's32[1]{0}', space=sflag, size = 0x4, scoped, tag = 'scoped memory for tpu_custom_call.1']
    #allocation4 [shape = 's32[1]{0}', space=sflag, size = 0x4, scoped, tag = 'scoped memory for tpu_custom_call.1']
    #allocation5 [shape = 'u8[65536]{0}', space=vmem, size = 0x10000, scoped, tag = 'input window, operand 1, single buffered']
    #allocation6 [shape = 's32[1]{0}', space=sflag, size = 0x4, scoped, tag = 'scoped memory for tpu_custom_call.1']
    #allocation7 [shape = 'u8[2048]{0}', space=vmem, size = 0x800, scoped, tag = 'output window, operand 0, single buffered']
    %8 = vsyncpa [#allocation3], 0
    %9 = vsyncpa [#allocation6], 0
    %10 = vsyncpa [#allocation4], 0
    // Predicated region
    $region2: #{tpu_custom_call.1} parent=1 // pred_check
      _
    $region3: #{tpu_custom_call.1} parent=1 // pred_check_branch
      %12 = sbr.rel (0) target = $region5
    $region4: #{tpu_custom_call.1} parent=1 // pred_region
      %s14 = ssub.s32 64, 64
      %15 = vsyncadd [#allocation3], %s14
      %s17 = sshll.u32 [#allocation2], 4
      %s18 = int_to_ptr.vmem [resolvable:$true] %s17
      %20 = dma.hbm_to_vmem [thread:$0]  %s0, 64, %s18, [#allocation3]
    $region5: #{tpu_custom_call.1} parent=1 // pred_fallthru
      _
    // Predicated region
    $region6: #{tpu_custom_call.1} parent=1 // pred_check
      _
    $region7: #{tpu_custom_call.1} parent=1 // pred_check_branch
      %22 = sbr.rel (0) target = $region9
    $region8: #{tpu_custom_call.1} parent=1 // pred_region
      %s24 = ssub.s32 2048, 2048
      %25 = vsyncadd [#allocation6], %s24
      %s26 = sshll.u32 [#allocation5], 4
      %s27 = int_to_ptr.vmem [resolvable:$true] %s26
      %32 = dma.hbm_to_vmem [thread:$0]  %s1, 2048, %s27, [#allocation6], 128, 128, 8
    $region9: #{tpu_custom_call.1} parent=1 // pred_fallthru
      _
    // Predicated region
    $region10: #{tpu_custom_call.1} parent=1 // pred_check
      _
    $region11: #{tpu_custom_call.1} parent=1 // pred_check_branch
      %34 = sbr.rel (0) target = $region13
    $region12: #{tpu_custom_call.1} parent=1 // pred_region
      _
    $region13: #{tpu_custom_call.1} parent=1 // pred_fallthru
      _
    // Predicated region
    $region14: #{tpu_custom_call.1} parent=1 // pred_check
      _
    $region15: #{tpu_custom_call.1} parent=1 // pred_check_branch
      %36 = sbr.rel (0) target = $region17
    $region16: #{tpu_custom_call.1} parent=1 // pred_region
      %37 = dma.done [#allocation3], 64
    $region17: #{tpu_custom_call.1} parent=1 // pred_fallthru
      _
    // Predicated region
    $region18: #{tpu_custom_call.1} parent=1 // pred_check
      _
    $region19: #{tpu_custom_call.1} parent=1 // pred_check_branch
      %39 = sbr.rel (0) target = $region21
    $region20: #{tpu_custom_call.1} parent=1 // pred_region
      %40 = dma.done [#allocation6], 2048
    $region21: #{tpu_custom_call.1} parent=1 // pred_fallthru
      _
    %v41 = vld [vmem:[#allocation2] sm:$0xf]
    %v42 = vld [vmem:[#allocation5] sm:$0xff]
    %v43 = vld [vmem:[#allocation5 + $0x8] sm:$0xff]
    %v44 = vld [vmem:[#allocation5 + $0x10] sm:$0xff]
    %v45 = vld [vmem:[#allocation5 + $0x18] sm:$0xff]
    %v46 = vld [vmem:[#allocation5 + $0x20] sm:$0xff]
    %v47 = vld [vmem:[#allocation5 + $0x28] sm:$0xff]
    %v48 = vld [vmem:[#allocation5 + $0x30] sm:$0xff]
    %v49 = vld [vmem:[#allocation5 + $0x38] sm:$0xff]
    %v50 = vld [vmem:[#allocation5 + $0x40] sm:$0xff]
    %v51 = vld [vmem:[#allocation5 + $0x48] sm:$0xff]
    %v52 = vld [vmem:[#allocation5 + $0x50] sm:$0xff]
    %v53 = vld [vmem:[#allocation5 + $0x58] sm:$0xff]
    %v54 = vld [vmem:[#allocation5 + $0x60] sm:$0xff]
    %v55 = vld [vmem:[#allocation5 + $0x68] sm:$0xff]
    %v56 = vld [vmem:[#allocation5 + $0x70] sm:$0xff]
    %v57 = vld [vmem:[#allocation5 + $0x78] sm:$0xff]
    %v58 = vld [vmem:[%s2] sm:$0x1]
    %v60 = vlaneseq
    %v61 = vshrl.u32 %v60, 7
    %v62 = vsub.s32 0, %v61
    %v63 = vrot.slane %v58, %v62
    %65 = vmatprep.subr.mxu0 0.0
    %66 = vmatpush1.msra.mxu0 %v42
    %67 = vmatprep.subr.mxu0 0.0
    %68 = vmatpush1.msra.mxu0 %v43
    %69 = vmatprep.subr.mxu0 0.0
    %70 = vmatpush1.msra.mxu0 %v44
    %71 = vmatprep.subr.mxu0 0.0
    %72 = vmatpush1.msra.mxu0 %v45
    %73 = vmatprep.subr.mxu0 0.0
    %74 = vmatpush1.msra.mxu0 %v46
    %75 = vmatprep.subr.mxu0 0.0
    %76 = vmatpush1.msra.mxu0 %v47
    %77 = vmatprep.subr.mxu0 0.0
    %78 = vmatpush1.msra.mxu0 %v48
    %79 = vmatprep.subr.mxu0 0.0
    %80 = vmatpush1.msra.mxu0 %v49
    %81 = vmatprep.subr.mxu0 0.0
    %82 = vmatpush1.msra.mxu0 %v50
    %83 = vmatprep.subr.mxu0 0.0
    %84 = vmatpush1.msra.mxu0 %v51
    %85 = vmatprep.subr.mxu0 0.0
    %86 = vmatpush1.msra.mxu0 %v52
    %87 = vmatprep.subr.mxu0 0.0
    %88 = vmatpush1.msra.mxu0 %v53
    %89 = vmatprep.subr.mxu0 0.0
    %90 = vmatpush1.msra.mxu0 %v54
    %91 = vmatprep.subr.mxu0 0.0
    %92 = vmatpush1.msra.mxu0 %v55
    %93 = vmatprep.subr.mxu0 0.0
    %94 = vmatpush1.msra.mxu0 %v56
    %95 = vmatprep.subr.mxu0 0.0
    %96 = vmatpush1.msra.mxu0 %v57
    %97 = vmatprep.subr.mxu0 0.0
    %98 = vmatpush1.msra.mxu0 0.0
    %99 = vmatprep.subr.mxu0 0.0
    %100 = vmatpush1.msra.mxu0 0.0
    %101 = vmatprep.subr.mxu0 0.0
    %102 = vmatpush1.msra.mxu0 0.0
    %103 = vmatprep.subr.mxu0 0.0
    %104 = vmatpush1.msra.mxu0 0.0
    %105 = vmatprep.subr.mxu0 0.0
    %106 = vmatpush1.msra.mxu0 0.0
    %107 = vmatprep.subr.mxu0 0.0
    %108 = vmatpush1.msra.mxu0 0.0
    %109 = vmatprep.subr.mxu0 0.0
    %110 = vmatpush1.msra.mxu0 0.0
    %111 = vmatprep.subr.mxu0 0.0
    %112 = vmatpush1.msra.mxu0 0.0
    %113 = vmatprep.subr.mxu0 0.0
    %114 = vmatpush1.msra.mxu0 0.0
    %115 = vmatprep.subr.mxu0 0.0
    %116 = vmatpush1.msra.mxu0 0.0
    %117 = vmatprep.subr.mxu0 0.0
    %118 = vmatpush1.msra.mxu0 0.0
    %119 = vmatprep.subr.mxu0 0.0
    %120 = vmatpush1.msra.mxu0 0.0
    %121 = vmatprep.subr.mxu0 0.0
    %122 = vmatpush1.msra.mxu0 0.0
    %123 = vmatprep.subr.mxu0 0.0
    %124 = vmatpush1.msra.mxu0 0.0
    %125 = vmatprep.subr.mxu0 0.0
    %126 = vmatpush1.msra.mxu0 0.0
    %127 = vmatprep.subr.mxu0 0.0
    %128 = vmatpush1.msra.mxu0 0.0
    %129 = vmatprep.mubr.f32.mxu0 0.0
    %130 = vmatmul.mubr.f32.gmra.mrb[0].mxu0 %v41
    %v131 = vpop.f32.mrb[0].mxu0
    %v132 = vadd.f32 %v63, %v131
    %v133 = vpop.f32.mrb[0].mxu0
    %134 = vdwg.mxu0
    %135 = vst [vmem:[#allocation7] sm:$0xf] %v132
    // Predicated region
    $region22: #{tpu_custom_call.1} parent=1 // pred_check
      _
    $region23: #{tpu_custom_call.1} parent=1 // pred_check_branch
      %137 = sbr.rel (0) target = $region25
    $region24: #{tpu_custom_call.1} parent=1 // pred_region
      %s139 = ssub.s32 64, 64
      %140 = vsyncadd [#allocation4], %s139
      %s142 = sshll.u32 [#allocation7], 4
      %s143 = int_to_ptr.vmem [resolvable:$true] %s142
      %145 = dma.vmem_to_hbm [thread:$0]  %s143, 64, %s3, [#allocation4]
    $region25: #{tpu_custom_call.1} parent=1 // pred_fallthru
      _
    // Predicated region
    $region26: #{tpu_custom_call.1} parent=1 // pred_check
      _
    $region27: #{tpu_custom_call.1} parent=1 // pred_check_branch
      %147 = sbr.rel (0) target = $region29
    $region28: #{tpu_custom_call.1} parent=1 // pred_region
      %148 = dma.done [#allocation4], 64
    $region29: #{tpu_custom_call.1} parent=1 // pred_fallthru
      _
    %149 = vsyncpa [#allocation3], 1
    %150 = vsyncpa [#allocation6], 1
    %151 = vsyncpa [#allocation4], 1

</llo_original>
